<compile_context>
chip_gen: v7x
topology: tpu7x:2x2x1
jax: 0.10.0
libtpu: 0.0.40
codegen_flags: <defaults>
</compile_context>

<pallas_src>
import functools

import jax
import jax.numpy as jnp
from jax import lax
from jax.experimental import pallas as pl
from jax.experimental.pallas import tpu as pltpu


def _gather_kernel(tile, window, tok_ref, emb_ref, out_ref, sems):
    """Gather `tile` embedding rows into the output tile.

    A bounded ring of `window` in-flight row DMAs is kept outstanding so the
    descriptor issue rate matches the completion rate without saturating the
    scalar / vector-misc slots or the DMA queue.

    tok_ref : (padded_n,) int32  scalar-prefetched token ids (SMEM)
    emb_ref : (V, D)             embedding table (HBM via pl.ANY, or VMEM-resident)
    out_ref : (tile, D)          VMEM output tile (auto-pipelined writeback)
    sems    : (window,)          shared ring of DMA semaphores
    """
    base = pl.program_id(0) * tile

    def start(j, t):
        pltpu.make_async_copy(
            emb_ref.at[pl.ds(t, 1), :],
            out_ref.at[pl.ds(j, 1), :],
            sems.at[j & (window - 1)],
        ).start()

    def wait(j):
        # A wait only needs the right semaphore slot and byte count (every row
        # copy is the same (1, D) size), so reuse a fixed row-0 descriptor:
        # no SMEM re-read of the token id, no repeated address arithmetic.
        pltpu.make_async_copy(
            emb_ref.at[pl.ds(0, 1), :],
            out_ref.at[pl.ds(0, 1), :],
            sems.at[j & (window - 1)],
        ).wait()

    # Prologue: fill the in-flight window.
    def _prime(j, c):
        start(j, tok_ref[base + j])
        return c

    lax.fori_loop(0, window, _prime, 0, unroll=True)

    # Steady state: read the next token id *before* the wait, retire the
    # oldest copy (freeing its semaphore slot), then issue the next copy.
    if tile > window:
        def _steady(j, c):
            t = tok_ref[base + j]
            wait(j - window)
            start(j, t)
            return c

        lax.fori_loop(window, tile, _steady, 0, unroll=4)

    # Epilogue: drain the remaining in-flight copies.
    def _drain(j, c):
        wait(j)
        return c

    lax.fori_loop(tile - window, tile, _drain, 0, unroll=True)


def _vmem_capacity_bytes():
    """Physical per-TensorCore VMEM (generation-aware); conservative fallback."""
    try:
        cap = int(pltpu.get_tpu_info().vmem_capacity_bytes)
        if cap > 0:
            return cap
    except Exception:  # interpret mode / query unavailable
        pass
    return 64 * 1024 * 1024  # v7x per-TC VMEM; v5e/v6e have 128 MiB


def _select_tile(n, requested, pack):
    """Rows per grid step.

    Must be a multiple of `pack` (dtype sublane packing: 8 f32 / 16 bf16 /
    32 int8-fp8).  Prefers an exact divisor of n (no padded rows -> no
    post-kernel slice copy) and >= 2 grid steps (so v7x megacore can shard the
    grid), without dropping below ~requested/4 (tiny tiles are grid-step
    overhead bound).  Returns (tile, pad_rows)."""
    requested = max(pack, (int(requested) // pack) * pack)
    if n <= pack:
        return pack, pack - n
    cap = min(requested, (n // pack) * pack)
    floor = max(pack, cap // 4)
    for t in range(cap, floor - 1, -pack):       # divisor of n with >= 2 steps
        if n % t == 0 and n // t >= 2:
            return t, 0
    for t in range(cap, floor - 1, -pack):       # any divisor of n (single step)
        if n % t == 0:
            return t, 0
    padded = ((n + cap - 1) // cap) * cap        # rare fallback: pad + slice
    return cap, padded - n


def fairseq_encoder_forward(src_tokens, src_lengths, embedding, *,
                            tokens_per_tile=256, dma_window=16,
                            table_in_vmem=None):
    """Pallas-backed forward: returns (encoder_out, encoder_padding_mask).

    encoder_out          : (B, S, D), dtype follows `embedding`
    encoder_padding_mask : (B, S) bool, True where position >= src_length (pad)

    tokens_per_tile : rows gathered per grid step (rounded to the dtype's
                      sublane pack factor; 128-512 is the sweet spot).
    dma_window      : max in-flight row DMAs per grid step (8-16; lean to 16+
                      on v5e to hide its higher relative DMA latency).
    table_in_vmem   : None = auto (stage the table into VMEM when it fits the
                      chip's VMEM budget - the v5e/v6e fast path); True/False
                      forces the placement.

    Note: token ids are scalar-prefetched into SMEM, which is fine for typical
    B*S (tens of thousands of int32 tokens); extremely long streams should be
    chunked by the caller.
    """
    B, S = src_tokens.shape
    V, D = embedding.shape
    dtype = embedding.dtype
    itemsize = jnp.dtype(dtype).itemsize
    pack = 8 * max(1, 4 // itemsize)             # 8 f32 / 16 bf16 / 32 int8-fp8

    # Clamp token ids: an out-of-range id would be an out-of-bounds DMA.
    # TODO(synk): fairseq would raise on a bad id; we clamp silently instead.
    tok = jnp.clip(src_tokens.astype(jnp.int32), 0, V - 1).reshape(-1)
    n = B * S

    vmem_cap = _vmem_capacity_bytes()
    budget = vmem_cap - (8 << 20)                # compiler / pipeline headroom
    row_bytes = D * itemsize
    table_bytes = V * D * itemsize

    # Cap the tile so the double-buffered output tile stays well inside VMEM.
    max_rows = max(pack, int(budget // (8 * row_bytes)))
    tile, pad = _select_tile(n, min(int(tokens_per_tile), max_rows), pack)
    padded_n = n + pad
    num_tiles = padded_n // tile
    tile_bytes = tile * row_bytes

    if pad:
        tok = jnp.pad(tok, (0, pad))             # pad with token 0 (valid row)

    # v5e/v6e fast path: table resident in VMEM (gathers become cheap local
    # VMEM->VMEM copies - no per-row HBM reads / read amplification).  The 2x
    # accounts for the pipeline's buffering of the (grid-invariant) table
    # block.  Big-vocab tables, and most v7x configs (64 MiB VMEM), take the
    # HBM-gather path instead.
    if table_in_vmem is None:
        use_vmem_table = (2 * table_bytes + 4 * tile_bytes) <= budget
    else:
        use_vmem_table = bool(table_in_vmem)

    if use_vmem_table:
        emb_spec = pl.BlockSpec((V, D), lambda i, tok: (0, 0))   # grid-invariant
        vmem_need = 2 * table_bytes + 4 * tile_bytes + (4 << 20)
    else:
        emb_spec = pl.BlockSpec(memory_space=pl.ANY)             # stays in HBM
        vmem_need = 4 * tile_bytes + (4 << 20)
    vmem_limit = int(max(16 << 20, min(vmem_cap - (4 << 20), vmem_need)))

    window = max(1, min(int(dma_window), tile))
    window = 1 << (window.bit_length() - 1)      # pow2 ring -> cheap slot math

    grid_spec = pltpu.PrefetchScalarGridSpec(
        num_scalar_prefetch=1,                   # token ids land in SMEM pre-grid
        grid=(num_tiles,),
        in_specs=[emb_spec],
        out_specs=pl.BlockSpec((tile, D), lambda i, tok: (i, 0)),
        scratch_shapes=[pltpu.SemaphoreType.DMA((window,))],
    )

    cost = pl.CostEstimate(
        flops=0, transcendentals=0,
        bytes_accessed=int((padded_n + n) * row_bytes + padded_n * 4
                           + (table_bytes if use_vmem_table else 0)))

    out_flat = pl.pallas_call(
        functools.partial(_gather_kernel, tile, window),
        out_shape=jax.ShapeDtypeStruct((padded_n, D), dtype),
        grid_spec=grid_spec,
        compiler_params=pltpu.CompilerParams(
            dimension_semantics=("parallel",),
            vmem_limit_bytes=vmem_limit,
        ),
        cost_estimate=cost,
    )(tok, embedding)

    encoder_out = (out_flat if pad == 0 else out_flat[:n]).reshape(B, S, D)

    # Padding mask in the wrapper (a lane-narrow (B, S) bool output would add a
    # second masked-store stream in-kernel).  True == pad (fairseq convention).
    if src_lengths is None:
        encoder_padding_mask = jnp.zeros((B, S), dtype=jnp.bool_)
    else:
        encoder_padding_mask = (
            jnp.arange(S, dtype=jnp.int32)[None, :]
            >= src_lengths.astype(jnp.int32)[:, None]
        )
    return encoder_out, encoder_padding_mask


def reorder_encoder_out(encoder_out, encoder_padding_mask, new_order):
    """Batch-reorder (plain JAX glue, mirrors FairseqEncoder.reorder_encoder_out)."""
    return encoder_out[new_order], encoder_padding_mask[new_order]


def max_positions():
    """Maximum input length supported by the encoder."""
    return 1000000.0


if __name__ == "__main__":
    # Small deterministic setup: vocab=64, embed_dim=128 (lane-aligned), batch=2, seq=8.
    B, S, V, D = 2, 8, 64, 128
    key = jax.random.PRNGKey(0)
    k_tok, k_emb = jax.random.split(key)

    src_tokens = jax.random.randint(k_tok, (B, S), minval=0, maxval=V, dtype=jnp.int32)
    src_lengths = jnp.array([8, 5], dtype=jnp.int32)
    embedding = jax.random.normal(k_emb, (V, D), dtype=jnp.float32) * 0.02

    ref_out = embedding[src_tokens]
    ref_mask = jnp.arange(S)[None, :] >= src_lengths[:, None]

    # 1) Auto path: the tiny table fits VMEM on every generation -> VMEM gather.
    out, mask = fairseq_encoder_forward(src_tokens, src_lengths, embedding)
    out = jax.block_until_ready(out)
    mask = jax.block_until_ready(mask)
    assert out.shape == (B, S, D) and mask.shape == (B, S)
    assert jnp.array_equal(out, ref_out), "embedding mismatch (VMEM-table path)"
    assert jnp.array_equal(mask, ref_mask), "padding mask mismatch"

    # 2) Forced HBM-gather path (what a real 50K+ vocab configuration takes).
    out_hbm, _ = fairseq_encoder_forward(src_tokens, src_lengths, embedding,
                                         table_in_vmem=False)
    out_hbm = jax.block_until_ready(out_hbm)
    assert jnp.array_equal(out_hbm, ref_out), "embedding mismatch (HBM-gather path)"

    # 3) bf16 table (halves HBM traffic on v6e/v7x); exercises packed-dtype
    #    tiles on both paths -- the gather is an exact copy either way.
    emb_bf16 = embedding.astype(jnp.bfloat16)
    ref_bf16 = emb_bf16[src_tokens]
    out_bf16_v, _ = fairseq_encoder_forward(src_tokens, src_lengths, emb_bf16)
    out_bf16_h, _ = fairseq_encoder_forward(src_tokens, src_lengths, emb_bf16,
                                            table_in_vmem=False)
    jax.block_until_ready((out_bf16_v, out_bf16_h))
    assert out_bf16_v.dtype == jnp.bfloat16
    assert jnp.array_equal(out_bf16_v, ref_bf16), "bf16 mismatch (VMEM-table path)"
    assert jnp.array_equal(out_bf16_h, ref_bf16), "bf16 mismatch (HBM-gather path)"

    # 4) Exercise the reorder path.
    new_order = jnp.array([1, 0], dtype=jnp.int32)
    ro, rm = reorder_encoder_out(out, mask, new_order)
    jax.block_until_ready(ro)
    assert jnp.array_equal(ro, ref_out[new_order])

    print("KERNEL_OK")
</pallas_src>

<mosaic_0001>
module attributes {stable_mosaic.version = 11 : i64} {
  func.func @_gather_kernel(%arg0: i32, %arg1: memref<16xi32, #tpu.memory_space<smem>>, %arg2: memref<64x128xf32, #tpu.memory_space<vmem>>, %arg3: memref<8x128xf32, #tpu.memory_space<vmem>>, %arg4: memref<8x!tpu.dma_semaphore, #tpu.memory_space<semaphore_mem>>) attributes {dimension_semantics = [#tpu.dimension_semantics<parallel>], iteration_bounds = array<i64: 2>, scalar_prefetch = 1 : i64, scratch_operands = 1 : i64, tpu.core_type = #tpu.core_type<tc>, window_params = [{pipeline_mode = #tpu.pipeline_mode<synchronous>, transform_indices = @transform_0, window_bounds = array<i64: 64, 128>}, {transform_indices = @transform_1, window_bounds = array<i64: 8, 128>}]} {
    %c8_i32 = arith.constant 8 : i32
    %0 = arith.muli %arg0, %c8_i32 : i32
    %c0_i32 = arith.constant 0 : i32
    %1 = arith.addi %0, %c0_i32 : i32
    %2 = arith.index_cast %1 : i32 to index
    %3 = memref.load %arg1[%2] : memref<16xi32, #tpu.memory_space<smem>>
    %c7_i32 = arith.constant 7 : i32
    %4 = arith.andi %c0_i32, %c7_i32 : i32
    %c0_i32_0 = arith.constant 0 : i32
    %5 = tpu.memref_slice %arg2[%3, %c0_i32_0] : memref<64x128xf32, #tpu.memory_space<vmem>> -> memref<1x128xf32, #tpu.memory_space<vmem>>
    %c0_i32_1 = arith.constant 0 : i32
    %6 = tpu.memref_slice %arg3[%c0_i32, %c0_i32_1] : memref<8x128xf32, #tpu.memory_space<vmem>> -> memref<1x128xf32, #tpu.memory_space<vmem>>
    %7 = tpu.memref_slice %arg4[%4] : memref<8x!tpu.dma_semaphore, #tpu.memory_space<semaphore_mem>> -> memref<1x!tpu.dma_semaphore, #tpu.memory_space<semaphore_mem>>
    %8 = tpu.memref_squeeze %7 : memref<1x!tpu.dma_semaphore, #tpu.memory_space<semaphore_mem>> -> memref<!tpu.dma_semaphore, #tpu.memory_space<semaphore_mem>>
    tpu.enqueue_dma source(%5 : memref<1x128xf32, #tpu.memory_space<vmem>>) target(%6 : memref<1x128xf32, #tpu.memory_space<vmem>>) target_semaphore(%8 : memref<!tpu.dma_semaphore, #tpu.memory_space<semaphore_mem>>)
    %c1_i32 = arith.constant 1 : i32
    %9 = arith.addi %0, %c1_i32 : i32
    %10 = arith.index_cast %9 : i32 to index
    %11 = memref.load %arg1[%10] : memref<16xi32, #tpu.memory_space<smem>>
    %c7_i32_2 = arith.constant 7 : i32
    %12 = arith.andi %c1_i32, %c7_i32_2 : i32
    %c0_i32_3 = arith.constant 0 : i32
    %13 = tpu.memref_slice %arg2[%11, %c0_i32_3] : memref<64x128xf32, #tpu.memory_space<vmem>> -> memref<1x128xf32, #tpu.memory_space<vmem>>
    %c0_i32_4 = arith.constant 0 : i32
    %14 = tpu.memref_slice %arg3[%c1_i32, %c0_i32_4] : memref<8x128xf32, #tpu.memory_space<vmem>> -> memref<1x128xf32, #tpu.memory_space<vmem>>
    %15 = tpu.memref_slice %arg4[%12] : memref<8x!tpu.dma_semaphore, #tpu.memory_space<semaphore_mem>> -> memref<1x!tpu.dma_semaphore, #tpu.memory_space<semaphore_mem>>
    %16 = tpu.memref_squeeze %15 : memref<1x!tpu.dma_semaphore, #tpu.memory_space<semaphore_mem>> -> memref<!tpu.dma_semaphore, #tpu.memory_space<semaphore_mem>>
    tpu.enqueue_dma source(%13 : memref<1x128xf32, #tpu.memory_space<vmem>>) target(%14 : memref<1x128xf32, #tpu.memory_space<vmem>>) target_semaphore(%16 : memref<!tpu.dma_semaphore, #tpu.memory_space<semaphore_mem>>)
    %c2_i32 = arith.constant 2 : i32
    %17 = arith.addi %0, %c2_i32 : i32
    %18 = arith.index_cast %17 : i32 to index
    %19 = memref.load %arg1[%18] : memref<16xi32, #tpu.memory_space<smem>>
    %c7_i32_5 = arith.constant 7 : i32
    %20 = arith.andi %c2_i32, %c7_i32_5 : i32
    %c0_i32_6 = arith.constant 0 : i32
    %21 = tpu.memref_slice %arg2[%19, %c0_i32_6] : memref<64x128xf32, #tpu.memory_space<vmem>> -> memref<1x128xf32, #tpu.memory_space<vmem>>
    %c0_i32_7 = arith.constant 0 : i32
    %22 = tpu.memref_slice %arg3[%c2_i32, %c0_i32_7] : memref<8x128xf32, #tpu.memory_space<vmem>> -> memref<1x128xf32, #tpu.memory_space<vmem>>
    %23 = tpu.memref_slice %arg4[%20] : memref<8x!tpu.dma_semaphore, #tpu.memory_space<semaphore_mem>> -> memref<1x!tpu.dma_semaphore, #tpu.memory_space<semaphore_mem>>
    %24 = tpu.memref_squeeze %23 : memref<1x!tpu.dma_semaphore, #tpu.memory_space<semaphore_mem>> -> memref<!tpu.dma_semaphore, #tpu.memory_space<semaphore_mem>>
    tpu.enqueue_dma source(%21 : memref<1x128xf32, #tpu.memory_space<vmem>>) target(%22 : memref<1x128xf32, #tpu.memory_space<vmem>>) target_semaphore(%24 : memref<!tpu.dma_semaphore, #tpu.memory_space<semaphore_mem>>)
    %c3_i32 = arith.constant 3 : i32
    %25 = arith.addi %0, %c3_i32 : i32
    %26 = arith.index_cast %25 : i32 to index
    %27 = memref.load %arg1[%26] : memref<16xi32, #tpu.memory_space<smem>>
    %c7_i32_8 = arith.constant 7 : i32
    %28 = arith.andi %c3_i32, %c7_i32_8 : i32
    %c0_i32_9 = arith.constant 0 : i32
    %29 = tpu.memref_slice %arg2[%27, %c0_i32_9] : memref<64x128xf32, #tpu.memory_space<vmem>> -> memref<1x128xf32, #tpu.memory_space<vmem>>
    %c0_i32_10 = arith.constant 0 : i32
    %30 = tpu.memref_slice %arg3[%c3_i32, %c0_i32_10] : memref<8x128xf32, #tpu.memory_space<vmem>> -> memref<1x128xf32, #tpu.memory_space<vmem>>
    %31 = tpu.memref_slice %arg4[%28] : memref<8x!tpu.dma_semaphore, #tpu.memory_space<semaphore_mem>> -> memref<1x!tpu.dma_semaphore, #tpu.memory_space<semaphore_mem>>
    %32 = tpu.memref_squeeze %31 : memref<1x!tpu.dma_semaphore, #tpu.memory_space<semaphore_mem>> -> memref<!tpu.dma_semaphore, #tpu.memory_space<semaphore_mem>>
    tpu.enqueue_dma source(%29 : memref<1x128xf32, #tpu.memory_space<vmem>>) target(%30 : memref<1x128xf32, #tpu.memory_space<vmem>>) target_semaphore(%32 : memref<!tpu.dma_semaphore, #tpu.memory_space<semaphore_mem>>)
    %c4_i32 = arith.constant 4 : i32
    %33 = arith.addi %0, %c4_i32 : i32
    %34 = arith.index_cast %33 : i32 to index
    %35 = memref.load %arg1[%34] : memref<16xi32, #tpu.memory_space<smem>>
    %c7_i32_11 = arith.constant 7 : i32
    %36 = arith.andi %c4_i32, %c7_i32_11 : i32
    %c0_i32_12 = arith.constant 0 : i32
    %37 = tpu.memref_slice %arg2[%35, %c0_i32_12] : memref<64x128xf32, #tpu.memory_space<vmem>> -> memref<1x128xf32, #tpu.memory_space<vmem>>
    %c0_i32_13 = arith.constant 0 : i32
    %38 = tpu.memref_slice %arg3[%c4_i32, %c0_i32_13] : memref<8x128xf32, #tpu.memory_space<vmem>> -> memref<1x128xf32, #tpu.memory_space<vmem>>
    %39 = tpu.memref_slice %arg4[%36] : memref<8x!tpu.dma_semaphore, #tpu.memory_space<semaphore_mem>> -> memref<1x!tpu.dma_semaphore, #tpu.memory_space<semaphore_mem>>
    %40 = tpu.memref_squeeze %39 : memref<1x!tpu.dma_semaphore, #tpu.memory_space<semaphore_mem>> -> memref<!tpu.dma_semaphore, #tpu.memory_space<semaphore_mem>>
    tpu.enqueue_dma source(%37 : memref<1x128xf32, #tpu.memory_space<vmem>>) target(%38 : memref<1x128xf32, #tpu.memory_space<vmem>>) target_semaphore(%40 : memref<!tpu.dma_semaphore, #tpu.memory_space<semaphore_mem>>)
    %c5_i32 = arith.constant 5 : i32
    %41 = arith.addi %0, %c5_i32 : i32
    %42 = arith.index_cast %41 : i32 to index
    %43 = memref.load %arg1[%42] : memref<16xi32, #tpu.memory_space<smem>>
    %c7_i32_14 = arith.constant 7 : i32
    %44 = arith.andi %c5_i32, %c7_i32_14 : i32
    %c0_i32_15 = arith.constant 0 : i32
    %45 = tpu.memref_slice %arg2[%43, %c0_i32_15] : memref<64x128xf32, #tpu.memory_space<vmem>> -> memref<1x128xf32, #tpu.memory_space<vmem>>
    %c0_i32_16 = arith.constant 0 : i32
    %46 = tpu.memref_slice %arg3[%c5_i32, %c0_i32_16] : memref<8x128xf32, #tpu.memory_space<vmem>> -> memref<1x128xf32, #tpu.memory_space<vmem>>
    %47 = tpu.memref_slice %arg4[%44] : memref<8x!tpu.dma_semaphore, #tpu.memory_space<semaphore_mem>> -> memref<1x!tpu.dma_semaphore, #tpu.memory_space<semaphore_mem>>
    %48 = tpu.memref_squeeze %47 : memref<1x!tpu.dma_semaphore, #tpu.memory_space<semaphore_mem>> -> memref<!tpu.dma_semaphore, #tpu.memory_space<semaphore_mem>>
    tpu.enqueue_dma source(%45 : memref<1x128xf32, #tpu.memory_space<vmem>>) target(%46 : memref<1x128xf32, #tpu.memory_space<vmem>>) target_semaphore(%48 : memref<!tpu.dma_semaphore, #tpu.memory_space<semaphore_mem>>)
    %c6_i32 = arith.constant 6 : i32
    %49 = arith.addi %0, %c6_i32 : i32
    %50 = arith.index_cast %49 : i32 to index
    %51 = memref.load %arg1[%50] : memref<16xi32, #tpu.memory_space<smem>>
    %c7_i32_17 = arith.constant 7 : i32
    %52 = arith.andi %c6_i32, %c7_i32_17 : i32
    %c0_i32_18 = arith.constant 0 : i32
    %53 = tpu.memref_slice %arg2[%51, %c0_i32_18] : memref<64x128xf32, #tpu.memory_space<vmem>> -> memref<1x128xf32, #tpu.memory_space<vmem>>
    %c0_i32_19 = arith.constant 0 : i32
    %54 = tpu.memref_slice %arg3[%c6_i32, %c0_i32_19] : memref<8x128xf32, #tpu.memory_space<vmem>> -> memref<1x128xf32, #tpu.memory_space<vmem>>
    %55 = tpu.memref_slice %arg4[%52] : memref<8x!tpu.dma_semaphore, #tpu.memory_space<semaphore_mem>> -> memref<1x!tpu.dma_semaphore, #tpu.memory_space<semaphore_mem>>
    %56 = tpu.memref_squeeze %55 : memref<1x!tpu.dma_semaphore, #tpu.memory_space<semaphore_mem>> -> memref<!tpu.dma_semaphore, #tpu.memory_space<semaphore_mem>>
    tpu.enqueue_dma source(%53 : memref<1x128xf32, #tpu.memory_space<vmem>>) target(%54 : memref<1x128xf32, #tpu.memory_space<vmem>>) target_semaphore(%56 : memref<!tpu.dma_semaphore, #tpu.memory_space<semaphore_mem>>)
    %c7_i32_20 = arith.constant 7 : i32
    %57 = arith.addi %0, %c7_i32_20 : i32
    %58 = arith.index_cast %57 : i32 to index
    %59 = memref.load %arg1[%58] : memref<16xi32, #tpu.memory_space<smem>>
    %c7_i32_21 = arith.constant 7 : i32
    %60 = arith.andi %c7_i32_20, %c7_i32_21 : i32
    %c0_i32_22 = arith.constant 0 : i32
    %61 = tpu.memref_slice %arg2[%59, %c0_i32_22] : memref<64x128xf32, #tpu.memory_space<vmem>> -> memref<1x128xf32, #tpu.memory_space<vmem>>
    %c0_i32_23 = arith.constant 0 : i32
    %62 = tpu.memref_slice %arg3[%c7_i32_20, %c0_i32_23] : memref<8x128xf32, #tpu.memory_space<vmem>> -> memref<1x128xf32, #tpu.memory_space<vmem>>
    %63 = tpu.memref_slice %arg4[%60] : memref<8x!tpu.dma_semaphore, #tpu.memory_space<semaphore_mem>> -> memref<1x!tpu.dma_semaphore, #tpu.memory_space<semaphore_mem>>
    %64 = tpu.memref_squeeze %63 : memref<1x!tpu.dma_semaphore, #tpu.memory_space<semaphore_mem>> -> memref<!tpu.dma_semaphore, #tpu.memory_space<semaphore_mem>>
    tpu.enqueue_dma source(%61 : memref<1x128xf32, #tpu.memory_space<vmem>>) target(%62 : memref<1x128xf32, #tpu.memory_space<vmem>>) target_semaphore(%64 : memref<!tpu.dma_semaphore, #tpu.memory_space<semaphore_mem>>)
    %c8_i32_24 = arith.constant 8 : i32
    %c0_i32_25 = arith.constant 0 : i32
    %c7_i32_26 = arith.constant 7 : i32
    %65 = arith.andi %c0_i32_25, %c7_i32_26 : i32
    %c0_i32_27 = arith.constant 0 : i32
    %c0_i32_28 = arith.constant 0 : i32
    %66 = tpu.memref_slice %arg2[%c0_i32_27, %c0_i32_28] : memref<64x128xf32, #tpu.memory_space<vmem>> -> memref<1x128xf32, #tpu.memory_space<vmem>>
    %c0_i32_29 = arith.constant 0 : i32
    %c0_i32_30 = arith.constant 0 : i32
    %67 = tpu.memref_slice %arg3[%c0_i32_29, %c0_i32_30] : memref<8x128xf32, #tpu.memory_space<vmem>> -> memref<1x128xf32, #tpu.memory_space<vmem>>
    %68 = tpu.memref_slice %arg4[%65] : memref<8x!tpu.dma_semaphore, #tpu.memory_space<semaphore_mem>> -> memref<1x!tpu.dma_semaphore, #tpu.memory_space<semaphore_mem>>
    %69 = tpu.memref_squeeze %68 : memref<1x!tpu.dma_semaphore, #tpu.memory_space<semaphore_mem>> -> memref<!tpu.dma_semaphore, #tpu.memory_space<semaphore_mem>>
    tpu.wait_dma2 semaphore(%69 : memref<!tpu.dma_semaphore, #tpu.memory_space<semaphore_mem>>) src(%66 : memref<1x128xf32, #tpu.memory_space<vmem>>) dst(%67 : memref<1x128xf32, #tpu.memory_space<vmem>>)
    %c1_i32_31 = arith.constant 1 : i32
    %c7_i32_32 = arith.constant 7 : i32
    %70 = arith.andi %c1_i32_31, %c7_i32_32 : i32
    %c0_i32_33 = arith.constant 0 : i32
    %c0_i32_34 = arith.constant 0 : i32
    %71 = tpu.memref_slice %arg2[%c0_i32_33, %c0_i32_34] : memref<64x128xf32, #tpu.memory_space<vmem>> -> memref<1x128xf32, #tpu.memory_space<vmem>>
    %c0_i32_35 = arith.constant 0 : i32
    %c0_i32_36 = arith.constant 0 : i32
    %72 = tpu.memref_slice %arg3[%c0_i32_35, %c0_i32_36] : memref<8x128xf32, #tpu.memory_space<vmem>> -> memref<1x128xf32, #tpu.memory_space<vmem>>
    %73 = tpu.memref_slice %arg4[%70] : memref<8x!tpu.dma_semaphore, #tpu.memory_space<semaphore_mem>> -> memref<1x!tpu.dma_semaphore, #tpu.memory_space<semaphore_mem>>
    %74 = tpu.memref_squeeze %73 : memref<1x!tpu.dma_semaphore, #tpu.memory_space<semaphore_mem>> -> memref<!tpu.dma_semaphore, #tpu.memory_space<semaphore_mem>>
    tpu.wait_dma2 semaphore(%74 : memref<!tpu.dma_semaphore, #tpu.memory_space<semaphore_mem>>) src(%71 : memref<1x128xf32, #tpu.memory_space<vmem>>) dst(%72 : memref<1x128xf32, #tpu.memory_space<vmem>>)
    %c2_i32_37 = arith.constant 2 : i32
    %c7_i32_38 = arith.constant 7 : i32
    %75 = arith.andi %c2_i32_37, %c7_i32_38 : i32
    %c0_i32_39 = arith.constant 0 : i32
    %c0_i32_40 = arith.constant 0 : i32
    %76 = tpu.memref_slice %arg2[%c0_i32_39, %c0_i32_40] : memref<64x128xf32, #tpu.memory_space<vmem>> -> memref<1x128xf32, #tpu.memory_space<vmem>>
    %c0_i32_41 = arith.constant 0 : i32
    %c0_i32_42 = arith.constant 0 : i32
    %77 = tpu.memref_slice %arg3[%c0_i32_41, %c0_i32_42] : memref<8x128xf32, #tpu.memory_space<vmem>> -> memref<1x128xf32, #tpu.memory_space<vmem>>
    %78 = tpu.memref_slice %arg4[%75] : memref<8x!tpu.dma_semaphore, #tpu.memory_space<semaphore_mem>> -> memref<1x!tpu.dma_semaphore, #tpu.memory_space<semaphore_mem>>
    %79 = tpu.memref_squeeze %78 : memref<1x!tpu.dma_semaphore, #tpu.memory_space<semaphore_mem>> -> memref<!tpu.dma_semaphore, #tpu.memory_space<semaphore_mem>>
    tpu.wait_dma2 semaphore(%79 : memref<!tpu.dma_semaphore, #tpu.memory_space<semaphore_mem>>) src(%76 : memref<1x128xf32, #tpu.memory_space<vmem>>) dst(%77 : memref<1x128xf32, #tpu.memory_space<vmem>>)
    %c3_i32_43 = arith.constant 3 : i32
    %c7_i32_44 = arith.constant 7 : i32
    %80 = arith.andi %c3_i32_43, %c7_i32_44 : i32
    %c0_i32_45 = arith.constant 0 : i32
    %c0_i32_46 = arith.constant 0 : i32
    %81 = tpu.memref_slice %arg2[%c0_i32_45, %c0_i32_46] : memref<64x128xf32, #tpu.memory_space<vmem>> -> memref<1x128xf32, #tpu.memory_space<vmem>>
    %c0_i32_47 = arith.constant 0 : i32
    %c0_i32_48 = arith.constant 0 : i32
    %82 = tpu.memref_slice %arg3[%c0_i32_47, %c0_i32_48] : memref<8x128xf32, #tpu.memory_space<vmem>> -> memref<1x128xf32, #tpu.memory_space<vmem>>
    %83 = tpu.memref_slice %arg4[%80] : memref<8x!tpu.dma_semaphore, #tpu.memory_space<semaphore_mem>> -> memref<1x!tpu.dma_semaphore, #tpu.memory_space<semaphore_mem>>
    %84 = tpu.memref_squeeze %83 : memref<1x!tpu.dma_semaphore, #tpu.memory_space<semaphore_mem>> -> memref<!tpu.dma_semaphore, #tpu.memory_space<semaphore_mem>>
    tpu.wait_dma2 semaphore(%84 : memref<!tpu.dma_semaphore, #tpu.memory_space<semaphore_mem>>) src(%81 : memref<1x128xf32, #tpu.memory_space<vmem>>) dst(%82 : memref<1x128xf32, #tpu.memory_space<vmem>>)
    %c4_i32_49 = arith.constant 4 : i32
    %c7_i32_50 = arith.constant 7 : i32
    %85 = arith.andi %c4_i32_49, %c7_i32_50 : i32
    %c0_i32_51 = arith.constant 0 : i32
    %c0_i32_52 = arith.constant 0 : i32
    %86 = tpu.memref_slice %arg2[%c0_i32_51, %c0_i32_52] : memref<64x128xf32, #tpu.memory_space<vmem>> -> memref<1x128xf32, #tpu.memory_space<vmem>>
    %c0_i32_53 = arith.constant 0 : i32
    %c0_i32_54 = arith.constant 0 : i32
    %87 = tpu.memref_slice %arg3[%c0_i32_53, %c0_i32_54] : memref<8x128xf32, #tpu.memory_space<vmem>> -> memref<1x128xf32, #tpu.memory_space<vmem>>
    %88 = tpu.memref_slice %arg4[%85] : memref<8x!tpu.dma_semaphore, #tpu.memory_space<semaphore_mem>> -> memref<1x!tpu.dma_semaphore, #tpu.memory_space<semaphore_mem>>
    %89 = tpu.memref_squeeze %88 : memref<1x!tpu.dma_semaphore, #tpu.memory_space<semaphore_mem>> -> memref<!tpu.dma_semaphore, #tpu.memory_space<semaphore_mem>>
    tpu.wait_dma2 semaphore(%89 : memref<!tpu.dma_semaphore, #tpu.memory_space<semaphore_mem>>) src(%86 : memref<1x128xf32, #tpu.memory_space<vmem>>) dst(%87 : memref<1x128xf32, #tpu.memory_space<vmem>>)
    %c5_i32_55 = arith.constant 5 : i32
    %c7_i32_56 = arith.constant 7 : i32
    %90 = arith.andi %c5_i32_55, %c7_i32_56 : i32
    %c0_i32_57 = arith.constant 0 : i32
    %c0_i32_58 = arith.constant 0 : i32
    %91 = tpu.memref_slice %arg2[%c0_i32_57, %c0_i32_58] : memref<64x128xf32, #tpu.memory_space<vmem>> -> memref<1x128xf32, #tpu.memory_space<vmem>>
    %c0_i32_59 = arith.constant 0 : i32
    %c0_i32_60 = arith.constant 0 : i32
    %92 = tpu.memref_slice %arg3[%c0_i32_59, %c0_i32_60] : memref<8x128xf32, #tpu.memory_space<vmem>> -> memref<1x128xf32, #tpu.memory_space<vmem>>
    %93 = tpu.memref_slice %arg4[%90] : memref<8x!tpu.dma_semaphore, #tpu.memory_space<semaphore_mem>> -> memref<1x!tpu.dma_semaphore, #tpu.memory_space<semaphore_mem>>
    %94 = tpu.memref_squeeze %93 : memref<1x!tpu.dma_semaphore, #tpu.memory_space<semaphore_mem>> -> memref<!tpu.dma_semaphore, #tpu.memory_space<semaphore_mem>>
    tpu.wait_dma2 semaphore(%94 : memref<!tpu.dma_semaphore, #tpu.memory_space<semaphore_mem>>) src(%91 : memref<1x128xf32, #tpu.memory_space<vmem>>) dst(%92 : memref<1x128xf32, #tpu.memory_space<vmem>>)
    %c6_i32_61 = arith.constant 6 : i32
    %c7_i32_62 = arith.constant 7 : i32
    %95 = arith.andi %c6_i32_61, %c7_i32_62 : i32
    %c0_i32_63 = arith.constant 0 : i32
    %c0_i32_64 = arith.constant 0 : i32
    %96 = tpu.memref_slice %arg2[%c0_i32_63, %c0_i32_64] : memref<64x128xf32, #tpu.memory_space<vmem>> -> memref<1x128xf32, #tpu.memory_space<vmem>>
    %c0_i32_65 = arith.constant 0 : i32
    %c0_i32_66 = arith.constant 0 : i32
    %97 = tpu.memref_slice %arg3[%c0_i32_65, %c0_i32_66] : memref<8x128xf32, #tpu.memory_space<vmem>> -> memref<1x128xf32, #tpu.memory_space<vmem>>
    %98 = tpu.memref_slice %arg4[%95] : memref<8x!tpu.dma_semaphore, #tpu.memory_space<semaphore_mem>> -> memref<1x!tpu.dma_semaphore, #tpu.memory_space<semaphore_mem>>
    %99 = tpu.memref_squeeze %98 : memref<1x!tpu.dma_semaphore, #tpu.memory_space<semaphore_mem>> -> memref<!tpu.dma_semaphore, #tpu.memory_space<semaphore_mem>>
    tpu.wait_dma2 semaphore(%99 : memref<!tpu.dma_semaphore, #tpu.memory_space<semaphore_mem>>) src(%96 : memref<1x128xf32, #tpu.memory_space<vmem>>) dst(%97 : memref<1x128xf32, #tpu.memory_space<vmem>>)
    %c7_i32_67 = arith.constant 7 : i32
    %c7_i32_68 = arith.constant 7 : i32
    %100 = arith.andi %c7_i32_67, %c7_i32_68 : i32
    %c0_i32_69 = arith.constant 0 : i32
    %c0_i32_70 = arith.constant 0 : i32
    %101 = tpu.memref_slice %arg2[%c0_i32_69, %c0_i32_70] : memref<64x128xf32, #tpu.memory_space<vmem>> -> memref<1x128xf32, #tpu.memory_space<vmem>>
    %c0_i32_71 = arith.constant 0 : i32
    %c0_i32_72 = arith.constant 0 : i32
    %102 = tpu.memref_slice %arg3[%c0_i32_71, %c0_i32_72] : memref<8x128xf32, #tpu.memory_space<vmem>> -> memref<1x128xf32, #tpu.memory_space<vmem>>
    %103 = tpu.memref_slice %arg4[%100] : memref<8x!tpu.dma_semaphore, #tpu.memory_space<semaphore_mem>> -> memref<1x!tpu.dma_semaphore, #tpu.memory_space<semaphore_mem>>
    %104 = tpu.memref_squeeze %103 : memref<1x!tpu.dma_semaphore, #tpu.memory_space<semaphore_mem>> -> memref<!tpu.dma_semaphore, #tpu.memory_space<semaphore_mem>>
    tpu.wait_dma2 semaphore(%104 : memref<!tpu.dma_semaphore, #tpu.memory_space<semaphore_mem>>) src(%101 : memref<1x128xf32, #tpu.memory_space<vmem>>) dst(%102 : memref<1x128xf32, #tpu.memory_space<vmem>>)
    %c8_i32_73 = arith.constant 8 : i32
    return
  }
  func.func @transform_0(%arg0: i32, %arg1: memref<16xi32, #tpu.memory_space<smem>>) -> (i32, i32) {
    %c0_i32 = arith.constant 0 : i32
    %c0_i32_0 = arith.constant 0 : i32
    %c0_i32_1 = arith.constant 0 : i32
    return %c0_i32, %c0_i32_0 : i32, i32
  }
  func.func @transform_1(%arg0: i32, %arg1: memref<16xi32, #tpu.memory_space<smem>>) -> (i32, i32) {
    %c0_i32 = arith.constant 0 : i32
    %c0_i32_0 = arith.constant 0 : i32
    return %arg0, %c0_i32 : i32, i32
  }
}

</mosaic_0001>

<llo_original>
// kernel: tpu_custom_call.1
$region0: #{tpu_custom_call.1}
  #allocation0 [shape = 'u32[]', space=smem, size = 0x4, offset = 0x4, fixed_abs, tag = 'smem constant byte address 0x4 - core index']
  #allocation1 [shape = 'u32[144,128]{1,0:T(1,128)}', space=vmem, size = 0x12000, scoped, tag = 'internal scratch']
  #allocation2 [shape = 's32[8]{0}', space=sflag, size = 0x20, scoped, tag = 'scratch operand']
  #allocation3 [shape = 's32[1]{0}', space=sflag, size = 0x4, scoped, tag = 'scoped memory for tpu_custom_call.1']
  #allocation4 [shape = 'u8[512]{0}', space=smem, size = 0x200, scoped, tag = 'prefetched SMEM operand 0']
  #allocation9 [shape = 's32[]', space=sflag, size = 0x4, offset = 0, fixed_abs, tag = 'sflag constant byte address 0x0 - dummy sync flag']
  #allocation10 [shape = 's32[]', space=sflag, size = 0x4, offset = 0, fixed_abs, tag = 'sflag constant byte address 0x0 - dummy sync flag']
  #allocation11 [shape = 's32[]', space=sflag, size = 0x4, offset = 0, fixed_abs, tag = 'sflag constant byte address 0x0 - dummy sync flag']
  #allocation12 [shape = 's32[]', space=sflag, size = 0x4, offset = 0, fixed_abs, tag = 'sflag constant byte address 0x0 - dummy sync flag']
  #allocation13 [shape = 's32[]', space=sflag, size = 0x4, offset = 0, fixed_abs, tag = 'sflag constant byte address 0x0 - dummy sync flag']
  #allocation14 [shape = 's32[]', space=sflag, size = 0x4, offset = 0, fixed_abs, tag = 'sflag constant byte address 0x0 - dummy sync flag']
  #allocation15 [shape = 's32[]', space=sflag, size = 0x4, offset = 0, fixed_abs, tag = 'sflag constant byte address 0x0 - dummy sync flag']
  #allocation16 [shape = 's32[]', space=sflag, size = 0x4, offset = 0, fixed_abs, tag = 'sflag constant byte address 0x0 - dummy sync flag']
  %s0 = inlined_call_operand.hbm [shape: s32[16], index: 0, kind: input, shape index: {}]
  %s1 = inlined_call_operand.hbm [shape: f32[64,128], index: 1, kind: input, shape index: {}]
  %s2 = inlined_call_operand.hbm [shape: f32[16,128], index: 2, kind: output, shape index: {}]
  %s3 = sld [smem:[#allocation0]]
  $region281: #{tpu_custom_call.1} parent=0
    _
  %s5 = ssub.s32 1, %s3
  %s6 = scalar_select 0, %s5, %s3
  %8 = dma.hbm_to_smem %s0, 16, [#allocation4], [#allocation3]
  %9 = dma.done [#allocation3], 16
  %10 = sfence
  $region1: #{tpu_custom_call.1} parent=0
    #allocation5 [shape = 'u8[32768]{0}', space=vmem, size = 0x8000, scoped, tag = 'input window, operand 1, single buffered']
    #allocation6 [shape = 's32[2]{0}', space=sflag, size = 0x8, scoped, tag = 'scoped memory for tpu_custom_call.1']
    #allocation7 [shape = 's32[2]{0}', space=sflag, size = 0x8, scoped, tag = 'scoped memory for tpu_custom_call.1']
    #allocation8 [shape = 'u8[8192]{0}', space=vmem, size = 0x2000, scoped, tag = 'output window, operand 0']
    %11 = vsyncpa [#allocation6], 0
    %12 = vsyncpa [#allocation7], 0
    %s13 = scalar_lea.sflag [#allocation7], 1
    %14 = vsyncpa %s13, 0
    loop: start=0, step=1, limit=4
    $region2: #{tpu_custom_call.1} parent=1 // loop_pre_header
      _
    $region3: #{tpu_custom_call.1} parent=1 // loop_header
      %s16 = sphi 0, %s20
      %p17 = scmp.ge.s32.totalorder %s16, 4
      %s24 = sphi 0, %s24
      %s26 = sphi 0, %s24
      %s27 = sphi 0, %s26
      %s41 = sphi 0, %s27
      %s47 = sphi 0, %s49
      %s50 = sphi 0, %s47
      %s51 = sphi 0, %s50
      %s67 = sphi 0, %s51
    $region4: #{tpu_custom_call.1} parent=1 // loop_header_branch
      %19 = sbr.rel (%p17) target = $region8
    $region5: #{tpu_custom_call.1} parent=1 // loop_body
      %s21 = ssub.s32 %s16, 1
      %s22 = ssub.s32 %s16, 2
      %s23 = sadd.s32 %s16, 1
      %s25 = sadd.s32 %s24, 1
      %p28 = scmp.eq.s32.totalorder %s16, 1
      %p29 = scmp.ne.s32.totalorder %s24, %s26
      %p30 = scmp.eq.s32.totalorder %s16, 0
      %p31 = por %p29, %p30
      %p32 = scmp.ne.s32.totalorder %s24, %s26
      %p33 = scmp.eq.s32.totalorder %s21, 1
      %p34 = por %p32, %p33
      %p35 = scmp.ne.s32.totalorder %s26, %s27
      %p36 = scmp.eq.s32.totalorder %s21, 0
      %p37 = por %p35, %p36
      %p38 = scmp.ne.s32.totalorder %s26, %s27
      %p39 = scmp.eq.s32.totalorder %s22, 1
      %p40 = por %p38, %p39
      %p42 = scmp.ne.s32.totalorder %s27, %s41
      %p43 = scmp.eq.s32.totalorder %s22, 0
      %p44 = por %p42, %p43
      %s45 = ssub.s32 %s16, %s23
      %p46 = scmp.eq.s32.totalorder %s45, 0
      %s48 = sadd.s32 %s47, 1
      %s49 = scalar_select %p46, %s47, %s48
      %p52 = pneg %p46
      %p53 = scmp.eq.s32.totalorder %s16, 1
      %p54 = por %p52, %p53
      %p55 = scmp.ne.s32.totalorder %s47, %s50
      %p56 = scmp.eq.s32.totalorder %s16, 0
      %p57 = por %p55, %p56
      %p58 = scmp.ne.s32.totalorder %s47, %s50
      %p59 = scmp.eq.s32.totalorder %s21, 1
      %p60 = por %p58, %p59
      %p61 = scmp.ne.s32.totalorder %s50, %s51
      %p62 = scmp.eq.s32.totalorder %s21, 0
      %p63 = por %p61, %p62
      %p64 = scmp.ne.s32.totalorder %s50, %s51
      %p65 = scmp.eq.s32.totalorder %s22, 1
      %p66 = por %p64, %p65
      %p68 = scmp.ne.s32.totalorder %s51, %s67
      %p69 = scmp.eq.s32.totalorder %s22, 0
      %p70 = por %p68, %p69
      %p71 = scmp.le.s32.totalorder 1, %s16
      %p72 = scmp.lt.s32.totalorder %s16, 3
      %p73 = pnand %p71, %p72
      %p74 = pneg %p73
      // Predicated region
      $region9: #{tpu_custom_call.1} parent=5 // pred_check
        _
      $region10: #{tpu_custom_call.1} parent=5 // pred_check_branch
        %76 = sbr.rel (%p73) target = $region12
      $region11: #{tpu_custom_call.1} parent=5 // pred_region
        %s77 = ssub.s32 %s16, 1
        // Predicated region
        $region13: #{tpu_custom_call.1} parent=11 // pred_check
          %p78 = pneg %p37
        $region14: #{tpu_custom_call.1} parent=11 // pred_check_branch
          %80 = sbr.rel (%p78) target = $region16
        $region15: #{tpu_custom_call.1} parent=11 // pred_region
          %s82 = ssub.s32 1024, 1024
          %83 = vsyncadd [#allocation6], %s82
          %s84 = sshll.u32 [#allocation5], 4
          %s85 = int_to_ptr.vmem [resolvable:$true] %s84
          %90 = dma.hbm_to_vmem [thread:$0]  %s1, 1024, %s85, [#allocation6], 128, 128, 8
        $region16: #{tpu_custom_call.1} parent=11 // pred_fallthru
          _
      $region12: #{tpu_custom_call.1} parent=5 // pred_fallthru
        _
      %p91 = scmp.lt.s32.totalorder %s16, 2
      // Predicated region
      $region17: #{tpu_custom_call.1} parent=5 // pred_check
        %p92 = pneg %p91
      $region18: #{tpu_custom_call.1} parent=5 // pred_check_branch
        %94 = sbr.rel (%p92) target = $region20
      $region19: #{tpu_custom_call.1} parent=5 // pred_region
        _
      $region20: #{tpu_custom_call.1} parent=5 // pred_fallthru
        _
      %p95 = scmp.le.s32.totalorder 1, %s16
      %p96 = scmp.lt.s32.totalorder %s16, 3
      %p97 = pnand %p95, %p96
      %p98 = pneg %p97
      // Predicated region
      $region21: #{tpu_custom_call.1} parent=5 // pred_check
        _
      $region22: #{tpu_custom_call.1} parent=5 // pred_check_branch
        %100 = sbr.rel (%p97) target = $region24
      $region23: #{tpu_custom_call.1} parent=5 // pred_region
        %s101 = ssub.s32 %s16, 1
        // Predicated region
        $region25: #{tpu_custom_call.1} parent=23 // pred_check
          %p102 = pneg %p37
        $region26: #{tpu_custom_call.1} parent=23 // pred_check_branch
          %104 = sbr.rel (%p102) target = $region28
        $region27: #{tpu_custom_call.1} parent=23 // pred_region
          %105 = dma.done [#allocation6], 1024
        $region28: #{tpu_custom_call.1} parent=23 // pred_fallthru
          _
        %p106 = pneg %p37
        %p107 = pneg %p34
        %p108 = pneg %p63
        %p109 = pneg %p60
        %s110 = sand.u32 %s50, 1
        %s111 = scalar_lea.sflag [#allocation7], %s110
        %s112 = sand.u32 %s50, 1
        %s113 = smul.addr %s112, 8
        %s114 = scalar_lea.vmem [#allocation8], %s113
        %s115 = smul.u32 %s21, 8
        %s116 = sld [smem:[#allocation4 + %s115]]
        %s117 = scalar_lea.vmem [#allocation5], %s116
        %p119 = scmp.lt.u32.totalorder 1, 8
        %p120 = pneg %p119
        // Predicated region
        $region29: #{tpu_custom_call.1} parent=23 // pred_check
          _
        $region30: #{tpu_custom_call.1} parent=23 // pred_check_branch
          %122 = sbr.rel (%p119) target = $region32
        $region31: #{tpu_custom_call.1} parent=23 // pred_region
          %s137 = sand.u32 1, 7
          %p138 = scmp.eq.s32.totalorder %s137, 0
          %p139 = pneg %p138
          // Predicated region
          $region44: #{tpu_custom_call.1} parent=31 // pred_check
            _
          $region45: #{tpu_custom_call.1} parent=31 // pred_check_branch
            %141 = sbr.rel (%p138) target = $region47
          $region46: #{tpu_custom_call.1} parent=31 // pred_region
            %s142 = sand.u32 1, 7
            %s143 = ssub.s32 1, %s142
            %s144 = scalar_lea.vmem %s117, %s143 [#allocation5]
            %s145 = ssub.s32 1, %s142
            %s146 = scalar_lea.vmem %s114, %s145 [#allocation8]
            %s147 = sshllo.u32 0, %s142
            loop: start=0, step=1, limit=1
            $region48: #{tpu_custom_call.1} parent=46 // loop_pre_header
              _
            $region49: #{tpu_custom_call.1} parent=46 // loop_header
              %s149 = sphi 0, %s153
              %p150 = scmp.ge.s32.totalorder %s149, 1
              %s154 = sphi %s144, %s144
              %s155 = sphi %s146, %s146
            $region50: #{tpu_custom_call.1} parent=46 // loop_header_branch
              %152 = sbr.rel (%p150) target = $region54
            $region51: #{tpu_custom_call.1} parent=46 // loop_body
              %v156 = vld [vmem:[%s154] sm:%s147]
              %157 = vst [vmem:[%s155] sm:%s147] %v156
            $region52: #{tpu_custom_call.1} parent=46 // loop_footer
              %s153 = sadd.s32 1, %s149
            $region53: #{tpu_custom_call.1} parent=46 // loop_footer_branch
              %148 = sbr.rel target = $region49
            $region54: #{tpu_custom_call.1} parent=46 // loop_exit
              _
          $region47: #{tpu_custom_call.1} parent=31 // pred_fallthru
            _
        $region32: #{tpu_custom_call.1} parent=23 // pred_fallthru
          _
        // Predicated region
        $region33: #{tpu_custom_call.1} parent=23 // pred_check
          %p123 = pneg %p119
        $region34: #{tpu_custom_call.1} parent=23 // pred_check_branch
          %125 = sbr.rel (%p123) target = $region36
        $region35: #{tpu_custom_call.1} parent=23 // pred_region
          %s126 = sshllo.u32 0, 1
          loop: start=0, step=1, limit=1
          $region37: #{tpu_custom_call.1} parent=35 // loop_pre_header
            _
          $region38: #{tpu_custom_call.1} parent=35 // loop_header
            %s128 = sphi 0, %s132
            %p129 = scmp.ge.s32.totalorder %s128, 1
            %s133 = sphi %s117, %s117
            %s134 = sphi %s114, %s114
          $region39: #{tpu_custom_call.1} parent=35 // loop_header_branch
            %131 = sbr.rel (%p129) target = $region43
          $region40: #{tpu_custom_call.1} parent=35 // loop_body
            %v135 = vld [vmem:[%s133] sm:%s126]
            %136 = vst [vmem:[%s134] sm:%s126] %v135
          $region41: #{tpu_custom_call.1} parent=35 // loop_footer
            %s132 = sadd.s32 1, %s128
          $region42: #{tpu_custom_call.1} parent=35 // loop_footer_branch
            %127 = sbr.rel target = $region38
          $region43: #{tpu_custom_call.1} parent=35 // loop_exit
            _
        $region36: #{tpu_custom_call.1} parent=23 // pred_fallthru
          _
        // Predicated region
        $region55: #{tpu_custom_call.1} parent=23 // pred_check
          _
        $region56: #{tpu_custom_call.1} parent=23 // pred_check_branch
          %160 = sbr.rel (0) target = $region58
        $region57: #{tpu_custom_call.1} parent=23 // pred_region
          %161 = vsyncadd [#allocation2], 16
        $region58: #{tpu_custom_call.1} parent=23 // pred_fallthru
          _
        %s162 = sadd.s32 %s115, 1
        %s163 = sld [smem:[#allocation4 + %s162]]
        %s164 = scalar_lea.vmem [#allocation5], %s163
        %s165 = scalar_lea.vmem %s114, 1 [#allocation8]
        %s166 = scalar_lea.sflag [#allocation2], 1
        %p168 = scmp.lt.u32.totalorder 1, 8
        %p169 = pneg %p168
        // Predicated region
        $region59: #{tpu_custom_call.1} parent=23 // pred_check
          _
        $region60: #{tpu_custom_call.1} parent=23 // pred_check_branch
          %171 = sbr.rel (%p168) target = $region62
        $region61: #{tpu_custom_call.1} parent=23 // pred_region
          %s186 = sand.u32 1, 7
          %p187 = scmp.eq.s32.totalorder %s186, 0
          %p188 = pneg %p187
          // Predicated region
          $region74: #{tpu_custom_call.1} parent=61 // pred_check
            _
          $region75: #{tpu_custom_call.1} parent=61 // pred_check_branch
            %190 = sbr.rel (%p187) target = $region77
          $region76: #{tpu_custom_call.1} parent=61 // pred_region
            %s191 = sand.u32 1, 7
            %s192 = ssub.s32 1, %s191
            %s193 = scalar_lea.vmem %s164, %s192 [#allocation5]
            %s194 = ssub.s32 1, %s191
            %s195 = scalar_lea.vmem %s165, %s194 [#allocation8]
            %s196 = sshllo.u32 0, %s191
            loop: start=0, step=1, limit=1
            $region78: #{tpu_custom_call.1} parent=76 // loop_pre_header
              _
            $region79: #{tpu_custom_call.1} parent=76 // loop_header
              %s198 = sphi 0, %s202
              %p199 = scmp.ge.s32.totalorder %s198, 1
              %s203 = sphi %s193, %s193
              %s204 = sphi %s195, %s195
            $region80: #{tpu_custom_call.1} parent=76 // loop_header_branch
              %201 = sbr.rel (%p199) target = $region84
            $region81: #{tpu_custom_call.1} parent=76 // loop_body
              %v205 = vld [vmem:[%s203] sm:%s196]
              %206 = vst [vmem:[%s204] sm:%s196] %v205
            $region82: #{tpu_custom_call.1} parent=76 // loop_footer
              %s202 = sadd.s32 1, %s198
            $region83: #{tpu_custom_call.1} parent=76 // loop_footer_branch
              %197 = sbr.rel target = $region79
            $region84: #{tpu_custom_call.1} parent=76 // loop_exit
              _
          $region77: #{tpu_custom_call.1} parent=61 // pred_fallthru
            _
        $region62: #{tpu_custom_call.1} parent=23 // pred_fallthru
          _
        // Predicated region
        $region63: #{tpu_custom_call.1} parent=23 // pred_check
          %p172 = pneg %p168
        $region64: #{tpu_custom_call.1} parent=23 // pred_check_branch
          %174 = sbr.rel (%p172) target = $region66
        $region65: #{tpu_custom_call.1} parent=23 // pred_region
          %s175 = sshllo.u32 0, 1
          loop: start=0, step=1, limit=1
          $region67: #{tpu_custom_call.1} parent=65 // loop_pre_header
            _
          $region68: #{tpu_custom_call.1} parent=65 // loop_header
            %s177 = sphi 0, %s181
            %p178 = scmp.ge.s32.totalorder %s177, 1
            %s182 = sphi %s164, %s164
            %s183 = sphi %s165, %s165
          $region69: #{tpu_custom_call.1} parent=65 // loop_header_branch
            %180 = sbr.rel (%p178) target = $region73
          $region70: #{tpu_custom_call.1} parent=65 // loop_body
            %v184 = vld [vmem:[%s182] sm:%s175]
            %185 = vst [vmem:[%s183] sm:%s175] %v184
          $region71: #{tpu_custom_call.1} parent=65 // loop_footer
            %s181 = sadd.s32 1, %s177
          $region72: #{tpu_custom_call.1} parent=65 // loop_footer_branch
            %176 = sbr.rel target = $region68
          $region73: #{tpu_custom_call.1} parent=65 // loop_exit
            _
        $region66: #{tpu_custom_call.1} parent=23 // pred_fallthru
          _
        // Predicated region
        $region85: #{tpu_custom_call.1} parent=23 // pred_check
          _
        $region86: #{tpu_custom_call.1} parent=23 // pred_check_branch
          %209 = sbr.rel (0) target = $region88
        $region87: #{tpu_custom_call.1} parent=23 // pred_region
          %210 = vsyncadd %s166, 16
        $region88: #{tpu_custom_call.1} parent=23 // pred_fallthru
          _
        %s211 = sadd.s32 %s115, 2
        %s212 = sld [smem:[#allocation4 + %s211]]
        %s213 = scalar_lea.vmem [#allocation5], %s212
        %s214 = scalar_lea.vmem %s114, 2 [#allocation8]
        %s215 = scalar_lea.sflag [#allocation2], 2
        %p217 = scmp.lt.u32.totalorder 1, 8
        %p218 = pneg %p217
        // Predicated region
        $region89: #{tpu_custom_call.1} parent=23 // pred_check
          _
        $region90: #{tpu_custom_call.1} parent=23 // pred_check_branch
          %220 = sbr.rel (%p217) target = $region92
        $region91: #{tpu_custom_call.1} parent=23 // pred_region
          %s235 = sand.u32 1, 7
          %p236 = scmp.eq.s32.totalorder %s235, 0
          %p237 = pneg %p236
          // Predicated region
          $region104: #{tpu_custom_call.1} parent=91 // pred_check
            _
          $region105: #{tpu_custom_call.1} parent=91 // pred_check_branch
            %239 = sbr.rel (%p236) target = $region107
          $region106: #{tpu_custom_call.1} parent=91 // pred_region
            %s240 = sand.u32 1, 7
            %s241 = ssub.s32 1, %s240
            %s242 = scalar_lea.vmem %s213, %s241 [#allocation5]
            %s243 = ssub.s32 1, %s240
            %s244 = scalar_lea.vmem %s214, %s243 [#allocation8]
            %s245 = sshllo.u32 0, %s240
            loop: start=0, step=1, limit=1
            $region108: #{tpu_custom_call.1} parent=106 // loop_pre_header
              _
            $region109: #{tpu_custom_call.1} parent=106 // loop_header
              %s247 = sphi 0, %s251
              %p248 = scmp.ge.s32.totalorder %s247, 1
              %s252 = sphi %s242, %s242
              %s253 = sphi %s244, %s244
            $region110: #{tpu_custom_call.1} parent=106 // loop_header_branch
              %250 = sbr.rel (%p248) target = $region114
            $region111: #{tpu_custom_call.1} parent=106 // loop_body
              %v254 = vld [vmem:[%s252] sm:%s245]
              %255 = vst [vmem:[%s253] sm:%s245] %v254
            $region112: #{tpu_custom_call.1} parent=106 // loop_footer
              %s251 = sadd.s32 1, %s247
            $region113: #{tpu_custom_call.1} parent=106 // loop_footer_branch
              %246 = sbr.rel target = $region109
            $region114: #{tpu_custom_call.1} parent=106 // loop_exit
              _
          $region107: #{tpu_custom_call.1} parent=91 // pred_fallthru
            _
        $region92: #{tpu_custom_call.1} parent=23 // pred_fallthru
          _
        // Predicated region
        $region93: #{tpu_custom_call.1} parent=23 // pred_check
          %p221 = pneg %p217
        $region94: #{tpu_custom_call.1} parent=23 // pred_check_branch
          %223 = sbr.rel (%p221) target = $region96
        $region95: #{tpu_custom_call.1} parent=23 // pred_region
          %s224 = sshllo.u32 0, 1
          loop: start=0, step=1, limit=1
          $region97: #{tpu_custom_call.1} parent=95 // loop_pre_header
            _
          $region98: #{tpu_custom_call.1} parent=95 // loop_header
            %s226 = sphi 0, %s230
            %p227 = scmp.ge.s32.totalorder %s226, 1
            %s231 = sphi %s213, %s213
            %s232 = sphi %s214, %s214
          $region99: #{tpu_custom_call.1} parent=95 // loop_header_branch
            %229 = sbr.rel (%p227) target = $region103
          $region100: #{tpu_custom_call.1} parent=95 // loop_body
            %v233 = vld [vmem:[%s231] sm:%s224]
            %234 = vst [vmem:[%s232] sm:%s224] %v233
          $region101: #{tpu_custom_call.1} parent=95 // loop_footer
            %s230 = sadd.s32 1, %s226
          $region102: #{tpu_custom_call.1} parent=95 // loop_footer_branch
            %225 = sbr.rel target = $region98
          $region103: #{tpu_custom_call.1} parent=95 // loop_exit
            _
        $region96: #{tpu_custom_call.1} parent=23 // pred_fallthru
          _
        // Predicated region
        $region115: #{tpu_custom_call.1} parent=23 // pred_check
          _
        $region116: #{tpu_custom_call.1} parent=23 // pred_check_branch
          %258 = sbr.rel (0) target = $region118
        $region117: #{tpu_custom_call.1} parent=23 // pred_region
          %259 = vsyncadd %s215, 16
        $region118: #{tpu_custom_call.1} parent=23 // pred_fallthru
          _
        %s260 = sadd.s32 %s115, 3
        %s261 = sld [smem:[#allocation4 + %s260]]
        %s262 = scalar_lea.vmem [#allocation5], %s261
        %s263 = scalar_lea.vmem %s114, 3 [#allocation8]
        %s264 = scalar_lea.sflag [#allocation2], 3
        %p266 = scmp.lt.u32.totalorder 1, 8
        %p267 = pneg %p266
        // Predicated region
        $region119: #{tpu_custom_call.1} parent=23 // pred_check
          _
        $region120: #{tpu_custom_call.1} parent=23 // pred_check_branch
          %269 = sbr.rel (%p266) target = $region122
        $region121: #{tpu_custom_call.1} parent=23 // pred_region
          %s284 = sand.u32 1, 7
          %p285 = scmp.eq.s32.totalorder %s284, 0
          %p286 = pneg %p285
          // Predicated region
          $region134: #{tpu_custom_call.1} parent=121 // pred_check
            _
          $region135: #{tpu_custom_call.1} parent=121 // pred_check_branch
            %288 = sbr.rel (%p285) target = $region137
          $region136: #{tpu_custom_call.1} parent=121 // pred_region
            %s289 = sand.u32 1, 7
            %s290 = ssub.s32 1, %s289
            %s291 = scalar_lea.vmem %s262, %s290 [#allocation5]
            %s292 = ssub.s32 1, %s289
            %s293 = scalar_lea.vmem %s263, %s292 [#allocation8]
            %s294 = sshllo.u32 0, %s289
            loop: start=0, step=1, limit=1
            $region138: #{tpu_custom_call.1} parent=136 // loop_pre_header
              _
            $region139: #{tpu_custom_call.1} parent=136 // loop_header
              %s296 = sphi 0, %s300
              %p297 = scmp.ge.s32.totalorder %s296, 1
              %s301 = sphi %s291, %s291
              %s302 = sphi %s293, %s293
            $region140: #{tpu_custom_call.1} parent=136 // loop_header_branch
              %299 = sbr.rel (%p297) target = $region144
            $region141: #{tpu_custom_call.1} parent=136 // loop_body
              %v303 = vld [vmem:[%s301] sm:%s294]
              %304 = vst [vmem:[%s302] sm:%s294] %v303
            $region142: #{tpu_custom_call.1} parent=136 // loop_footer
              %s300 = sadd.s32 1, %s296
            $region143: #{tpu_custom_call.1} parent=136 // loop_footer_branch
              %295 = sbr.rel target = $region139
            $region144: #{tpu_custom_call.1} parent=136 // loop_exit
              _
          $region137: #{tpu_custom_call.1} parent=121 // pred_fallthru
            _
        $region122: #{tpu_custom_call.1} parent=23 // pred_fallthru
          _
        // Predicated region
        $region123: #{tpu_custom_call.1} parent=23 // pred_check
          %p270 = pneg %p266
        $region124: #{tpu_custom_call.1} parent=23 // pred_check_branch
          %272 = sbr.rel (%p270) target = $region126
        $region125: #{tpu_custom_call.1} parent=23 // pred_region
          %s273 = sshllo.u32 0, 1
          loop: start=0, step=1, limit=1
          $region127: #{tpu_custom_call.1} parent=125 // loop_pre_header
            _
          $region128: #{tpu_custom_call.1} parent=125 // loop_header
            %s275 = sphi 0, %s279
            %p276 = scmp.ge.s32.totalorder %s275, 1
            %s280 = sphi %s262, %s262
            %s281 = sphi %s263, %s263
          $region129: #{tpu_custom_call.1} parent=125 // loop_header_branch
            %278 = sbr.rel (%p276) target = $region133
          $region130: #{tpu_custom_call.1} parent=125 // loop_body
            %v282 = vld [vmem:[%s280] sm:%s273]
            %283 = vst [vmem:[%s281] sm:%s273] %v282
          $region131: #{tpu_custom_call.1} parent=125 // loop_footer
            %s279 = sadd.s32 1, %s275
          $region132: #{tpu_custom_call.1} parent=125 // loop_footer_branch
            %274 = sbr.rel target = $region128
          $region133: #{tpu_custom_call.1} parent=125 // loop_exit
            _
        $region126: #{tpu_custom_call.1} parent=23 // pred_fallthru
          _
        // Predicated region
        $region145: #{tpu_custom_call.1} parent=23 // pred_check
          _
        $region146: #{tpu_custom_call.1} parent=23 // pred_check_branch
          %307 = sbr.rel (0) target = $region148
        $region147: #{tpu_custom_call.1} parent=23 // pred_region
          %308 = vsyncadd %s264, 16
        $region148: #{tpu_custom_call.1} parent=23 // pred_fallthru
          _
        %s309 = sadd.s32 %s115, 4
        %s310 = sld [smem:[#allocation4 + %s309]]
        %s311 = scalar_lea.vmem [#allocation5], %s310
        %s312 = scalar_lea.vmem %s114, 4 [#allocation8]
        %s313 = scalar_lea.sflag [#allocation2], 4
        %p315 = scmp.lt.u32.totalorder 1, 8
        %p316 = pneg %p315
        // Predicated region
        $region149: #{tpu_custom_call.1} parent=23 // pred_check
          _
        $region150: #{tpu_custom_call.1} parent=23 // pred_check_branch
          %318 = sbr.rel (%p315) target = $region152
        $region151: #{tpu_custom_call.1} parent=23 // pred_region
          %s333 = sand.u32 1, 7
          %p334 = scmp.eq.s32.totalorder %s333, 0
          %p335 = pneg %p334
          // Predicated region
          $region164: #{tpu_custom_call.1} parent=151 // pred_check
            _
          $region165: #{tpu_custom_call.1} parent=151 // pred_check_branch
            %337 = sbr.rel (%p334) target = $region167
          $region166: #{tpu_custom_call.1} parent=151 // pred_region
            %s338 = sand.u32 1, 7
            %s339 = ssub.s32 1, %s338
            %s340 = scalar_lea.vmem %s311, %s339 [#allocation5]
            %s341 = ssub.s32 1, %s338
            %s342 = scalar_lea.vmem %s312, %s341 [#allocation8]
            %s343 = sshllo.u32 0, %s338
            loop: start=0, step=1, limit=1
            $region168: #{tpu_custom_call.1} parent=166 // loop_pre_header
              _
            $region169: #{tpu_custom_call.1} parent=166 // loop_header
              %s345 = sphi 0, %s349
              %p346 = scmp.ge.s32.totalorder %s345, 1
              %s350 = sphi %s340, %s340
              %s351 = sphi %s342, %s342
            $region170: #{tpu_custom_call.1} parent=166 // loop_header_branch
              %348 = sbr.rel (%p346) target = $region174
            $region171: #{tpu_custom_call.1} parent=166 // loop_body
              %v352 = vld [vmem:[%s350] sm:%s343]
              %353 = vst [vmem:[%s351] sm:%s343] %v352
            $region172: #{tpu_custom_call.1} parent=166 // loop_footer
              %s349 = sadd.s32 1, %s345
            $region173: #{tpu_custom_call.1} parent=166 // loop_footer_branch
              %344 = sbr.rel target = $region169
            $region174: #{tpu_custom_call.1} parent=166 // loop_exit
              _
          $region167: #{tpu_custom_call.1} parent=151 // pred_fallthru
            _
        $region152: #{tpu_custom_call.1} parent=23 // pred_fallthru
          _
        // Predicated region
        $region153: #{tpu_custom_call.1} parent=23 // pred_check
          %p319 = pneg %p315
        $region154: #{tpu_custom_call.1} parent=23 // pred_check_branch
          %321 = sbr.rel (%p319) target = $region156
        $region155: #{tpu_custom_call.1} parent=23 // pred_region
          %s322 = sshllo.u32 0, 1
          loop: start=0, step=1, limit=1
          $region157: #{tpu_custom_call.1} parent=155 // loop_pre_header
            _
          $region158: #{tpu_custom_call.1} parent=155 // loop_header
            %s324 = sphi 0, %s328
            %p325 = scmp.ge.s32.totalorder %s324, 1
            %s329 = sphi %s311, %s311
            %s330 = sphi %s312, %s312
          $region159: #{tpu_custom_call.1} parent=155 // loop_header_branch
            %327 = sbr.rel (%p325) target = $region163
          $region160: #{tpu_custom_call.1} parent=155 // loop_body
            %v331 = vld [vmem:[%s329] sm:%s322]
            %332 = vst [vmem:[%s330] sm:%s322] %v331
          $region161: #{tpu_custom_call.1} parent=155 // loop_footer
            %s328 = sadd.s32 1, %s324
          $region162: #{tpu_custom_call.1} parent=155 // loop_footer_branch
            %323 = sbr.rel target = $region158
          $region163: #{tpu_custom_call.1} parent=155 // loop_exit
            _
        $region156: #{tpu_custom_call.1} parent=23 // pred_fallthru
          _
        // Predicated region
        $region175: #{tpu_custom_call.1} parent=23 // pred_check
          _
        $region176: #{tpu_custom_call.1} parent=23 // pred_check_branch
          %356 = sbr.rel (0) target = $region178
        $region177: #{tpu_custom_call.1} parent=23 // pred_region
          %357 = vsyncadd %s313, 16
        $region178: #{tpu_custom_call.1} parent=23 // pred_fallthru
          _
        %s358 = sadd.s32 %s115, 5
        %s359 = sld [smem:[#allocation4 + %s358]]
        %s360 = scalar_lea.vmem [#allocation5], %s359
        %s361 = scalar_lea.vmem %s114, 5 [#allocation8]
        %s362 = scalar_lea.sflag [#allocation2], 5
        %p364 = scmp.lt.u32.totalorder 1, 8
        %p365 = pneg %p364
        // Predicated region
        $region179: #{tpu_custom_call.1} parent=23 // pred_check
          _
        $region180: #{tpu_custom_call.1} parent=23 // pred_check_branch
          %367 = sbr.rel (%p364) target = $region182
        $region181: #{tpu_custom_call.1} parent=23 // pred_region
          %s382 = sand.u32 1, 7
          %p383 = scmp.eq.s32.totalorder %s382, 0
          %p384 = pneg %p383
          // Predicated region
          $region194: #{tpu_custom_call.1} parent=181 // pred_check
            _
          $region195: #{tpu_custom_call.1} parent=181 // pred_check_branch
            %386 = sbr.rel (%p383) target = $region197
          $region196: #{tpu_custom_call.1} parent=181 // pred_region
            %s387 = sand.u32 1, 7
            %s388 = ssub.s32 1, %s387
            %s389 = scalar_lea.vmem %s360, %s388 [#allocation5]
            %s390 = ssub.s32 1, %s387
            %s391 = scalar_lea.vmem %s361, %s390 [#allocation8]
            %s392 = sshllo.u32 0, %s387
            loop: start=0, step=1, limit=1
            $region198: #{tpu_custom_call.1} parent=196 // loop_pre_header
              _
            $region199: #{tpu_custom_call.1} parent=196 // loop_header
              %s394 = sphi 0, %s398
              %p395 = scmp.ge.s32.totalorder %s394, 1
              %s399 = sphi %s389, %s389
              %s400 = sphi %s391, %s391
            $region200: #{tpu_custom_call.1} parent=196 // loop_header_branch
              %397 = sbr.rel (%p395) target = $region204
            $region201: #{tpu_custom_call.1} parent=196 // loop_body
              %v401 = vld [vmem:[%s399] sm:%s392]
              %402 = vst [vmem:[%s400] sm:%s392] %v401
            $region202: #{tpu_custom_call.1} parent=196 // loop_footer
              %s398 = sadd.s32 1, %s394
            $region203: #{tpu_custom_call.1} parent=196 // loop_footer_branch
              %393 = sbr.rel target = $region199
            $region204: #{tpu_custom_call.1} parent=196 // loop_exit
              _
          $region197: #{tpu_custom_call.1} parent=181 // pred_fallthru
            _
        $region182: #{tpu_custom_call.1} parent=23 // pred_fallthru
          _
        // Predicated region
        $region183: #{tpu_custom_call.1} parent=23 // pred_check
          %p368 = pneg %p364
        $region184: #{tpu_custom_call.1} parent=23 // pred_check_branch
          %370 = sbr.rel (%p368) target = $region186
        $region185: #{tpu_custom_call.1} parent=23 // pred_region
          %s371 = sshllo.u32 0, 1
          loop: start=0, step=1, limit=1
          $region187: #{tpu_custom_call.1} parent=185 // loop_pre_header
            _
          $region188: #{tpu_custom_call.1} parent=185 // loop_header
            %s373 = sphi 0, %s377
            %p374 = scmp.ge.s32.totalorder %s373, 1
            %s378 = sphi %s360, %s360
            %s379 = sphi %s361, %s361
          $region189: #{tpu_custom_call.1} parent=185 // loop_header_branch
            %376 = sbr.rel (%p374) target = $region193
          $region190: #{tpu_custom_call.1} parent=185 // loop_body
            %v380 = vld [vmem:[%s378] sm:%s371]
            %381 = vst [vmem:[%s379] sm:%s371] %v380
          $region191: #{tpu_custom_call.1} parent=185 // loop_footer
            %s377 = sadd.s32 1, %s373
          $region192: #{tpu_custom_call.1} parent=185 // loop_footer_branch
            %372 = sbr.rel target = $region188
          $region193: #{tpu_custom_call.1} parent=185 // loop_exit
            _
        $region186: #{tpu_custom_call.1} parent=23 // pred_fallthru
          _
        // Predicated region
        $region205: #{tpu_custom_call.1} parent=23 // pred_check
          _
        $region206: #{tpu_custom_call.1} parent=23 // pred_check_branch
          %405 = sbr.rel (0) target = $region208
        $region207: #{tpu_custom_call.1} parent=23 // pred_region
          %406 = vsyncadd %s362, 16
        $region208: #{tpu_custom_call.1} parent=23 // pred_fallthru
          _
        %s407 = sadd.s32 %s115, 6
        %s408 = sld [smem:[#allocation4 + %s407]]
        %s409 = scalar_lea.vmem [#allocation5], %s408
        %s410 = scalar_lea.vmem %s114, 6 [#allocation8]
        %s411 = scalar_lea.sflag [#allocation2], 6
        %p413 = scmp.lt.u32.totalorder 1, 8
        %p414 = pneg %p413
        // Predicated region
        $region209: #{tpu_custom_call.1} parent=23 // pred_check
          _
        $region210: #{tpu_custom_call.1} parent=23 // pred_check_branch
          %416 = sbr.rel (%p413) target = $region212
        $region211: #{tpu_custom_call.1} parent=23 // pred_region
          %s431 = sand.u32 1, 7
          %p432 = scmp.eq.s32.totalorder %s431, 0
          %p433 = pneg %p432
          // Predicated region
          $region224: #{tpu_custom_call.1} parent=211 // pred_check
            _
          $region225: #{tpu_custom_call.1} parent=211 // pred_check_branch
            %435 = sbr.rel (%p432) target = $region227
          $region226: #{tpu_custom_call.1} parent=211 // pred_region
            %s436 = sand.u32 1, 7
            %s437 = ssub.s32 1, %s436
            %s438 = scalar_lea.vmem %s409, %s437 [#allocation5]
            %s439 = ssub.s32 1, %s436
            %s440 = scalar_lea.vmem %s410, %s439 [#allocation8]
            %s441 = sshllo.u32 0, %s436
            loop: start=0, step=1, limit=1
            $region228: #{tpu_custom_call.1} parent=226 // loop_pre_header
              _
            $region229: #{tpu_custom_call.1} parent=226 // loop_header
              %s443 = sphi 0, %s447
              %p444 = scmp.ge.s32.totalorder %s443, 1
              %s448 = sphi %s438, %s438
              %s449 = sphi %s440, %s440
            $region230: #{tpu_custom_call.1} parent=226 // loop_header_branch
              %446 = sbr.rel (%p444) target = $region234
            $region231: #{tpu_custom_call.1} parent=226 // loop_body
              %v450 = vld [vmem:[%s448] sm:%s441]
              %451 = vst [vmem:[%s449] sm:%s441] %v450
            $region232: #{tpu_custom_call.1} parent=226 // loop_footer
              %s447 = sadd.s32 1, %s443
            $region233: #{tpu_custom_call.1} parent=226 // loop_footer_branch
              %442 = sbr.rel target = $region229
            $region234: #{tpu_custom_call.1} parent=226 // loop_exit
              _
          $region227: #{tpu_custom_call.1} parent=211 // pred_fallthru
            _
        $region212: #{tpu_custom_call.1} parent=23 // pred_fallthru
          _
        // Predicated region
        $region213: #{tpu_custom_call.1} parent=23 // pred_check
          %p417 = pneg %p413
        $region214: #{tpu_custom_call.1} parent=23 // pred_check_branch
          %419 = sbr.rel (%p417) target = $region216
        $region215: #{tpu_custom_call.1} parent=23 // pred_region
          %s420 = sshllo.u32 0, 1
          loop: start=0, step=1, limit=1
          $region217: #{tpu_custom_call.1} parent=215 // loop_pre_header
            _
          $region218: #{tpu_custom_call.1} parent=215 // loop_header
            %s422 = sphi 0, %s426
            %p423 = scmp.ge.s32.totalorder %s422, 1
            %s427 = sphi %s409, %s409
            %s428 = sphi %s410, %s410
          $region219: #{tpu_custom_call.1} parent=215 // loop_header_branch
            %425 = sbr.rel (%p423) target = $region223
          $region220: #{tpu_custom_call.1} parent=215 // loop_body
            %v429 = vld [vmem:[%s427] sm:%s420]
            %430 = vst [vmem:[%s428] sm:%s420] %v429
          $region221: #{tpu_custom_call.1} parent=215 // loop_footer
            %s426 = sadd.s32 1, %s422
          $region222: #{tpu_custom_call.1} parent=215 // loop_footer_branch
            %421 = sbr.rel target = $region218
          $region223: #{tpu_custom_call.1} parent=215 // loop_exit
            _
        $region216: #{tpu_custom_call.1} parent=23 // pred_fallthru
          _
        // Predicated region
        $region235: #{tpu_custom_call.1} parent=23 // pred_check
          _
        $region236: #{tpu_custom_call.1} parent=23 // pred_check_branch
          %454 = sbr.rel (0) target = $region238
        $region237: #{tpu_custom_call.1} parent=23 // pred_region
          %455 = vsyncadd %s411, 16
        $region238: #{tpu_custom_call.1} parent=23 // pred_fallthru
          _
        %s456 = sadd.s32 %s115, 7
        %s457 = sld [smem:[#allocation4 + %s456]]
        %s458 = scalar_lea.vmem [#allocation5], %s457
        %s459 = scalar_lea.vmem %s114, 7 [#allocation8]
        %s460 = scalar_lea.sflag [#allocation2], 7
        %p462 = scmp.lt.u32.totalorder 1, 8
        %p463 = pneg %p462
        // Predicated region
        $region239: #{tpu_custom_call.1} parent=23 // pred_check
          _
        $region240: #{tpu_custom_call.1} parent=23 // pred_check_branch
          %465 = sbr.rel (%p462) target = $region242
        $region241: #{tpu_custom_call.1} parent=23 // pred_region
          %s480 = sand.u32 1, 7
          %p481 = scmp.eq.s32.totalorder %s480, 0
          %p482 = pneg %p481
          // Predicated region
          $region254: #{tpu_custom_call.1} parent=241 // pred_check
            _
          $region255: #{tpu_custom_call.1} parent=241 // pred_check_branch
            %484 = sbr.rel (%p481) target = $region257
          $region256: #{tpu_custom_call.1} parent=241 // pred_region
            %s485 = sand.u32 1, 7
            %s486 = ssub.s32 1, %s485
            %s487 = scalar_lea.vmem %s458, %s486 [#allocation5]
            %s488 = ssub.s32 1, %s485
            %s489 = scalar_lea.vmem %s459, %s488 [#allocation8]
            %s490 = sshllo.u32 0, %s485
            loop: start=0, step=1, limit=1
            $region258: #{tpu_custom_call.1} parent=256 // loop_pre_header
              _
            $region259: #{tpu_custom_call.1} parent=256 // loop_header
              %s492 = sphi 0, %s496
              %p493 = scmp.ge.s32.totalorder %s492, 1
              %s497 = sphi %s487, %s487
              %s498 = sphi %s489, %s489
            $region260: #{tpu_custom_call.1} parent=256 // loop_header_branch
              %495 = sbr.rel (%p493) target = $region264
            $region261: #{tpu_custom_call.1} parent=256 // loop_body
              %v499 = vld [vmem:[%s497] sm:%s490]
              %500 = vst [vmem:[%s498] sm:%s490] %v499
            $region262: #{tpu_custom_call.1} parent=256 // loop_footer
              %s496 = sadd.s32 1, %s492
            $region263: #{tpu_custom_call.1} parent=256 // loop_footer_branch
              %491 = sbr.rel target = $region259
            $region264: #{tpu_custom_call.1} parent=256 // loop_exit
              _
          $region257: #{tpu_custom_call.1} parent=241 // pred_fallthru
            _
        $region242: #{tpu_custom_call.1} parent=23 // pred_fallthru
          _
        // Predicated region
        $region243: #{tpu_custom_call.1} parent=23 // pred_check
          %p466 = pneg %p462
        $region244: #{tpu_custom_call.1} parent=23 // pred_check_branch
          %468 = sbr.rel (%p466) target = $region246
        $region245: #{tpu_custom_call.1} parent=23 // pred_region
          %s469 = sshllo.u32 0, 1
          loop: start=0, step=1, limit=1
          $region247: #{tpu_custom_call.1} parent=245 // loop_pre_header
            _
          $region248: #{tpu_custom_call.1} parent=245 // loop_header
            %s471 = sphi 0, %s475
            %p472 = scmp.ge.s32.totalorder %s471, 1
            %s476 = sphi %s458, %s458
            %s477 = sphi %s459, %s459
          $region249: #{tpu_custom_call.1} parent=245 // loop_header_branch
            %474 = sbr.rel (%p472) target = $region253
          $region250: #{tpu_custom_call.1} parent=245 // loop_body
            %v478 = vld [vmem:[%s476] sm:%s469]
            %479 = vst [vmem:[%s477] sm:%s469] %v478
          $region251: #{tpu_custom_call.1} parent=245 // loop_footer
            %s475 = sadd.s32 1, %s471
          $region252: #{tpu_custom_call.1} parent=245 // loop_footer_branch
            %470 = sbr.rel target = $region248
          $region253: #{tpu_custom_call.1} parent=245 // loop_exit
            _
        $region246: #{tpu_custom_call.1} parent=23 // pred_fallthru
          _
        // Predicated region
        $region265: #{tpu_custom_call.1} parent=23 // pred_check
          _
        $region266: #{tpu_custom_call.1} parent=23 // pred_check_branch
          %503 = sbr.rel (0) target = $region268
        $region267: #{tpu_custom_call.1} parent=23 // pred_region
          %504 = vsyncadd %s460, 16
        $region268: #{tpu_custom_call.1} parent=23 // pred_fallthru
          _
        %s505 = smul.u32 1, 1
        %s506 = sshll.u32 %s505, 4
        %507 = dma.done [#allocation2], %s506
        %s508 = sshll.u32 %s505, 4
        %509 = dma.done %s166, %s508
        %s510 = sshll.u32 %s505, 4
        %511 = dma.done %s215, %s510
        %s512 = sshll.u32 %s505, 4
        %513 = dma.done %s264, %s512
        %s514 = sshll.u32 %s505, 4
        %515 = dma.done %s313, %s514
        %s516 = sshll.u32 %s505, 4
        %517 = dma.done %s362, %s516
        %s518 = sshll.u32 %s505, 4
        %519 = dma.done %s411, %s518
        %s520 = sshll.u32 %s505, 4
        %521 = dma.done %s460, %s520
        %s522 = sand.u32 %s50, 1
        %s523 = scalar_lea.sflag [#allocation7], %s522
        %s524 = sand.u32 %s50, 1
        %s525 = smul.addr %s524, 8
        %s526 = scalar_lea.vmem [#allocation8], %s525
        // Predicated region
        $region269: #{tpu_custom_call.1} parent=23 // pred_check
          %p527 = pneg %p60
        $region270: #{tpu_custom_call.1} parent=23 // pred_check_branch
          %529 = sbr.rel (%p527) target = $region272
        $region271: #{tpu_custom_call.1} parent=23 // pred_region
          %s531 = ssub.s32 128, 128
          %532 = vsyncadd %s523, %s531
          %s533 = smul.addr %s21, 128
          %s534 = scalar_lea.hbm %s2, %s533
          %s536 = sshll.u32 %s526, 4
          %s537 = int_to_ptr.vmem [resolvable:$true] %s536
          %539 = dma.vmem_to_hbm [thread:$0]  %s537, 128, %s534, %s523
        $region272: #{tpu_custom_call.1} parent=23 // pred_fallthru
          _
      $region24: #{tpu_custom_call.1} parent=5 // pred_fallthru
        _
      %p540 = scmp.le.s32.totalorder 2, %s16
      // Predicated region
      $region273: #{tpu_custom_call.1} parent=5 // pred_check
        %p541 = pneg %p540
      $region274: #{tpu_custom_call.1} parent=5 // pred_check_branch
        %543 = sbr.rel (%p541) target = $region276
      $region275: #{tpu_custom_call.1} parent=5 // pred_region
        %s544 = ssub.s32 %s16, 2
        // Predicated region
        $region277: #{tpu_custom_call.1} parent=275 // pred_check
          %p545 = pneg %p66
        $region278: #{tpu_custom_call.1} parent=275 // pred_check_branch
          %547 = sbr.rel (%p545) target = $region280
        $region279: #{tpu_custom_call.1} parent=275 // pred_region
          %s548 = sand.u32 %s51, 1
          %s549 = scalar_lea.sflag [#allocation7], %s548
          %s550 = sand.u32 %s51, 1
          %s551 = smul.addr %s550, 8
          %s552 = scalar_lea.vmem [#allocation8], %s551
          %553 = dma.done %s549, 128
        $region280: #{tpu_custom_call.1} parent=275 // pred_fallthru
          _
      $region276: #{tpu_custom_call.1} parent=5 // pred_fallthru
        _
    $region6: #{tpu_custom_call.1} parent=1 // loop_footer
      %s20 = sadd.s32 1, %s16
    $region7: #{tpu_custom_call.1} parent=1 // loop_footer_branch
      %15 = sbr.rel target = $region3
    $region8: #{tpu_custom_call.1} parent=1 // loop_exit
      _
    %554 = vsyncpa [#allocation6], 1
    %s555 = scalar_lea.sflag [#allocation6], 1
    %556 = vsyncpa %s555, 1
    %557 = vsyncpa [#allocation7], 1
    %s558 = scalar_lea.sflag [#allocation7], 1
    %559 = vsyncpa %s558, 1
  %560 = vsyncmov [#allocation2]
  %s561 = vpop.sfrf %560
  %p562 = scmp.eq.s32.totalorder %s561, 0
  %p563 = pneg %p562
  %565 = shalt.err (%p563)
  %s566 = scalar_lea.sflag [#allocation2], 1
  %567 = vsyncmov %s566
  %s568 = vpop.sfrf %567
  %p569 = scmp.eq.s32.totalorder %s568, 0
  %p570 = pneg %p569
  %572 = shalt.err (%p570)
  %s573 = scalar_lea.sflag [#allocation2], 2
  %574 = vsyncmov %s573
  %s575 = vpop.sfrf %574
  %p576 = scmp.eq.s32.totalorder %s575, 0
  %p577 = pneg %p576
  %579 = shalt.err (%p577)
  %s580 = scalar_lea.sflag [#allocation2], 3
  %581 = vsyncmov %s580
  %s582 = vpop.sfrf %581
  %p583 = scmp.eq.s32.totalorder %s582, 0
  %p584 = pneg %p583
  %586 = shalt.err (%p584)
  %s587 = scalar_lea.sflag [#allocation2], 4
  %588 = vsyncmov %s587
  %s589 = vpop.sfrf %588
  %p590 = scmp.eq.s32.totalorder %s589, 0
  %p591 = pneg %p590
  %593 = shalt.err (%p591)
  %s594 = scalar_lea.sflag [#allocation2], 5
  %595 = vsyncmov %s594
  %s596 = vpop.sfrf %595
  %p597 = scmp.eq.s32.totalorder %s596, 0
  %p598 = pneg %p597
  %600 = shalt.err (%p598)
  %s601 = scalar_lea.sflag [#allocation2], 6
  %602 = vsyncmov %s601
  %s603 = vpop.sfrf %602
  %p604 = scmp.eq.s32.totalorder %s603, 0
  %p605 = pneg %p604
  %607 = shalt.err (%p605)
  %s608 = scalar_lea.sflag [#allocation2], 7
  %609 = vsyncmov %s608
  %s610 = vpop.sfrf %609
  %p611 = scmp.eq.s32.totalorder %s610, 0
  %p612 = pneg %p611
  %614 = shalt.err (%p612)

</llo_original>
